<compile_context>
chip_gen: v7x
topology: tpu7x:2x2x1
jax: 0.10.0
libtpu: 0.0.40
codegen_flags: <defaults>
</compile_context>

<pallas_src>
import jax
import jax.numpy as jnp
from jax.experimental import pallas as pl
from jax.experimental.pallas import tpu as pltpu


def _fused_concat_linear_kernel(x_ref, w_ref, b_ref, o_ref):
    # x_ref: (tm, H)  compute dtype (bf16)
    # w_ref: (H, tn)  compute dtype (bf16); columns s*O..(s+1)*O == submodule s
    # b_ref: (1, tn)  float32
    # o_ref: (tm, tn) output dtype
    y = jnp.dot(x_ref[...], w_ref[...], preferred_element_type=jnp.float32)
    y = y + b_ref[...]
    o_ref[...] = y.astype(o_ref.dtype)


def _pick_tile(dim: int, max_tile: int, align: int) -> int:
    """Largest tile <= max_tile that divides dim; whole dim if it's small."""
    if dim <= max_tile:
        return dim
    t = max_tile - (max_tile % align)
    while t > align and dim % t != 0:
        t -= align
    return t


def concat_forward(x: jax.Array, w_stack: jax.Array, b_stack: jax.Array,
                   *, compute_dtype=jnp.bfloat16,
                   max_tm: int = 256, max_tn: int = 512) -> jax.Array:
    """Pallas implementation of Concat(Linear_0, ..., Linear_{S-1})(x).

    x:        (B, H)
    w_stack:  (S, H, O)   (already x@W oriented, i.e. torch weight transposed)
    b_stack:  (S, 1, O)
    returns:  (S*B, O)   == concat([x @ w_s + b_s for s], axis=0)
    """
    S, H, O = w_stack.shape
    B, H2 = x.shape
    assert H == H2

    N = S * O
    # Fuse the S submodules into one lane-dense weight slab:
    #   W_all[:, s*O + o] = w_stack[s, :, o];   b_all[0, s*O + o] = b_stack[s, 0, o]
    w_all = jnp.transpose(w_stack, (1, 0, 2)).reshape(H, N)
    b_all = b_stack.reshape(1, N).astype(jnp.float32)

    # bf16 operands for the MXU; accumulation stays f32 inside the kernel.
    x_c = x.astype(compute_dtype)
    w_c = w_all.astype(compute_dtype)

    tm = _pick_tile(B, max_tm, 8)       # row block (multiple of 8 or full B)
    tn = _pick_tile(N, max_tn, 128)     # column block (multiple of 128 or full N)
    grid = (B // tm, N // tn)           # (1, 1) at the demo shapes -> single step

    y = pl.pallas_call(
        _fused_concat_linear_kernel,
        out_shape=jax.ShapeDtypeStruct((B, N), x.dtype),
        grid=grid,
        in_specs=[
            pl.BlockSpec((tm, H), lambda i, j: (i, 0)),   # row block of x
            pl.BlockSpec((H, tn), lambda i, j: (0, j)),   # column block of W_all
            pl.BlockSpec((1, tn), lambda i, j: (0, j)),   # matching bias slab
        ],
        out_specs=pl.BlockSpec((tm, tn), lambda i, j: (i, j)),
        compiler_params=pltpu.CompilerParams(
            dimension_semantics=("parallel", "parallel"),
        ),
    )(x_c, w_c, b_all)

    # Layout plumbing outside the kernel: (B, S*O) -> (S, B, O) -> (S*B, O),
    # exactly torch.concat([sub(x) for sub in submodules], dim=0).
    return y.reshape(B, S, O).transpose(1, 0, 2).reshape(S * B, O)


if __name__ == "__main__":
    # Small shapes consistent with the module: S=2 submodules, batch B=8,
    # hidden H=32, output features O=64 (fused lane width S*O = 128).
    S, B, H, O = 2, 8, 32, 64

    key = jax.random.PRNGKey(0)
    kx, kw, kb = jax.random.split(key, 3)
    x = jax.random.normal(kx, (B, H), dtype=jnp.float32)
    # Deterministic synthetic parameters (as if each submodule were nn.Linear(H, O)).
    w_stack = jax.random.normal(kw, (S, H, O), dtype=jnp.float32) * 0.05
    b_stack = jax.random.normal(kb, (S, 1, O), dtype=jnp.float32) * 0.05

    out = concat_forward(x, w_stack, b_stack)
    out = jax.block_until_ready(out)
    assert out.shape == (S * B, O)

    # Tight reference: same bf16 operand rounding, f32 accumulate + f32 bias.
    x_r = x.astype(jnp.bfloat16).astype(jnp.float32)
    w_r = w_stack.astype(jnp.bfloat16).astype(jnp.float32)
    ref = jnp.concatenate([x_r @ w_r[s] + b_stack[s] for s in range(S)], axis=0)
    assert jnp.allclose(out, ref, atol=1e-3, rtol=1e-3)

    # Loose sanity check against full-f32 math (only bf16 operand rounding differs).
    ref_f32 = jnp.concatenate([x @ w_stack[s] + b_stack[s] for s in range(S)], axis=0)
    assert jnp.allclose(out, ref_f32, atol=5e-2, rtol=5e-2)

    print("KERNEL_OK")
</pallas_src>

<mosaic_0001>
module attributes {stable_mosaic.version = 11 : i64} {
  func.func @_fused_concat_linear_kernel(%arg0: i32, %arg1: i32, %arg2: memref<8x32xbf16, #tpu.memory_space<vmem>>, %arg3: memref<32x128xbf16, #tpu.memory_space<vmem>>, %arg4: memref<1x128xf32, #tpu.memory_space<vmem>>, %arg5: memref<8x128xf32, #tpu.memory_space<vmem>>) attributes {dimension_semantics = [#tpu.dimension_semantics<parallel>, #tpu.dimension_semantics<parallel>], iteration_bounds = array<i64: 1, 1>, scalar_prefetch = 0 : i64, scratch_operands = 0 : i64, tpu.core_type = #tpu.core_type<tc>, window_params = [{transform_indices = @transform_0, window_bounds = array<i64: 8, 32>}, {transform_indices = @transform_1, window_bounds = array<i64: 32, 128>}, {transform_indices = @transform_2, window_bounds = array<i64: 1, 128>}, {transform_indices = @transform_3, window_bounds = array<i64: 8, 128>}]} {
    %c0 = arith.constant 0 : index
    %c0_0 = arith.constant 0 : index
    %0 = vector.load %arg2[%c0, %c0_0] : memref<8x32xbf16, #tpu.memory_space<vmem>>, vector<8x32xbf16>
    %c0_1 = arith.constant 0 : index
    %c0_2 = arith.constant 0 : index
    %1 = vector.load %arg3[%c0_1, %c0_2] : memref<32x128xbf16, #tpu.memory_space<vmem>>, vector<32x128xbf16>
    %cst = arith.constant dense<0.000000e+00> : vector<8x128xf32>
    %2 = tpu.matmul %0, %1, %cst {dimension_numbers = #tpu.dot_dimension_numbers<[1], [0], [0], [1], [0, 0, 1, 1], [], []>} : vector<8x32xbf16>, vector<32x128xbf16>, vector<8x128xf32> -> vector<8x128xf32>
    %c0_3 = arith.constant 0 : index
    %c0_4 = arith.constant 0 : index
    %3 = vector.load %arg4[%c0_3, %c0_4] : memref<1x128xf32, #tpu.memory_space<vmem>>, vector<1x128xf32>
    %4 = vector.broadcast %3 : vector<1x128xf32> to vector<8x128xf32>
    %5 = arith.addf %2, %4 : vector<8x128xf32>
    %c0_5 = arith.constant 0 : index
    %c0_6 = arith.constant 0 : index
    %6 = vector.load %arg5[%c0_5, %c0_6] : memref<8x128xf32, #tpu.memory_space<vmem>>, vector<8x128xf32>
    tpu.vector_store %arg5[%c0_5, %c0_6], %5 {strides = array<i32>} : memref<8x128xf32, #tpu.memory_space<vmem>>, vector<8x128xf32>,
    return
  }
  func.func @transform_0(%arg0: i32, %arg1: i32) -> (i32, i32) {
    %c0_i32 = arith.constant 0 : i32
    %c0_i32_0 = arith.constant 0 : i32
    return %arg0, %c0_i32 : i32, i32
  }
  func.func @transform_1(%arg0: i32, %arg1: i32) -> (i32, i32) {
    %c0_i32 = arith.constant 0 : i32
    %c0_i32_0 = arith.constant 0 : i32
    return %c0_i32, %arg1 : i32, i32
  }
  func.func @transform_2(%arg0: i32, %arg1: i32) -> (i32, i32) {
    %c0_i32 = arith.constant 0 : i32
    %c0_i32_0 = arith.constant 0 : i32
    return %c0_i32, %arg1 : i32, i32
  }
  func.func @transform_3(%arg0: i32, %arg1: i32) -> (i32, i32) {
    %c0_i32 = arith.constant 0 : i32
    return %arg0, %arg1 : i32, i32
  }
}

</mosaic_0001>

<llo_original>
// kernel: tpu_custom_call.1
$region0: #{tpu_custom_call.1}
  #allocation0 [shape = 'u32[]', space=smem, size = 0x4, offset = 0x4, fixed_abs, tag = 'smem constant byte address 0x4 - core index']
  #allocation1 [shape = 'u32[144,128]{1,0:T(1,128)}', space=vmem, size = 0x12000, scoped, tag = 'internal scratch']
  %s0 = inlined_call_operand.hbm [shape: bf16[8,32], index: 0, kind: input, shape index: {}]
  %s1 = inlined_call_operand.hbm [shape: bf16[32,128], index: 1, kind: input, shape index: {}]
  %s2 = inlined_call_operand.vmem [shape: f32[1,128], index: 2, kind: input, shape index: {}]
  %s3 = inlined_call_operand.hbm [shape: f32[8,128], index: 3, kind: output, shape index: {}]
  %s4 = sld [smem:[#allocation0]]
  $region30: #{tpu_custom_call.1} parent=0
    _
  %s6 = ssub.s32 1, %s4
  %s7 = scalar_select 0, %s6, %s4
  $region1: #{tpu_custom_call.1} parent=0
    #allocation2 [shape = 'u8[2048]{0}', space=vmem, size = 0x800, scoped, tag = 'input window, operand 0, single buffered']
    #allocation3 [shape = 's32[1]{0}', space=sflag, size = 0x4, scoped, tag = 'scoped memory for tpu_custom_call.1']
    #allocation4 [shape = 's32[1]{0}', space=sflag, size = 0x4, scoped, tag = 'scoped memory for tpu_custom_call.1']
    #allocation5 [shape = 'u8[8192]{0}', space=vmem, size = 0x2000, scoped, tag = 'input window, operand 1, single buffered']
    #allocation6 [shape = 's32[1]{0}', space=sflag, size = 0x4, scoped, tag = 'scoped memory for tpu_custom_call.1']
    #allocation7 [shape = 'u8[4096]{0}', space=vmem, size = 0x1000, scoped, tag = 'output window, operand 0, single buffered']
    %8 = vsyncpa [#allocation3], 0
    %9 = vsyncpa [#allocation6], 0
    %10 = vsyncpa [#allocation4], 0
    // Predicated region
    $region2: #{tpu_custom_call.1} parent=1 // pred_check
      _
    $region3: #{tpu_custom_call.1} parent=1 // pred_check_branch
      %12 = sbr.rel (0) target = $region5
    $region4: #{tpu_custom_call.1} parent=1 // pred_region
      %s14 = ssub.s32 64, 64
      %15 = vsyncadd [#allocation3], %s14
      %s17 = sshll.u32 [#allocation2], 4
      %s18 = int_to_ptr.vmem [resolvable:$true] %s17
      %20 = dma.hbm_to_vmem [thread:$0]  %s0, 64, %s18, [#allocation3]
    $region5: #{tpu_custom_call.1} parent=1 // pred_fallthru
      _
    // Predicated region
    $region6: #{tpu_custom_call.1} parent=1 // pred_check
      _
    $region7: #{tpu_custom_call.1} parent=1 // pred_check_branch
      %22 = sbr.rel (0) target = $region9
    $region8: #{tpu_custom_call.1} parent=1 // pred_region
      %s24 = ssub.s32 256, 256
      %25 = vsyncadd [#allocation6], %s24
      %s26 = sshll.u32 [#allocation5], 4
      %s27 = int_to_ptr.vmem [resolvable:$true] %s26
      %32 = dma.hbm_to_vmem [thread:$0]  %s1, 256, %s27, [#allocation6], 64, 64, 4
    $region9: #{tpu_custom_call.1} parent=1 // pred_fallthru
      _
    // Predicated region
    $region10: #{tpu_custom_call.1} parent=1 // pred_check
      _
    $region11: #{tpu_custom_call.1} parent=1 // pred_check_branch
      %34 = sbr.rel (0) target = $region13
    $region12: #{tpu_custom_call.1} parent=1 // pred_region
      _
    $region13: #{tpu_custom_call.1} parent=1 // pred_fallthru
      _
    // Predicated region
    $region14: #{tpu_custom_call.1} parent=1 // pred_check
      _
    $region15: #{tpu_custom_call.1} parent=1 // pred_check_branch
      %36 = sbr.rel (0) target = $region17
    $region16: #{tpu_custom_call.1} parent=1 // pred_region
      %37 = dma.done [#allocation3], 64
    $region17: #{tpu_custom_call.1} parent=1 // pred_fallthru
      _
    // Predicated region
    $region18: #{tpu_custom_call.1} parent=1 // pred_check
      _
    $region19: #{tpu_custom_call.1} parent=1 // pred_check_branch
      %39 = sbr.rel (0) target = $region21
    $region20: #{tpu_custom_call.1} parent=1 // pred_region
      %40 = dma.done [#allocation6], 256
    $region21: #{tpu_custom_call.1} parent=1 // pred_fallthru
      _
    %v42 = vld [vmem:[#allocation2] sm:$0xf]
    %v43 = vld [vmem:[#allocation5] sm:$0xf]
    %v44 = vld [vmem:[#allocation5 + $0x4] sm:$0xf]
    %v45 = vld [vmem:[#allocation5 + $0x8] sm:$0xf]
    %v46 = vld [vmem:[#allocation5 + $0xc] sm:$0xf]
    %v47 = vld [vmem:[%s2] sm:$0x1]
    %v49 = vlaneseq
    %v50 = vshrl.u32 %v49, 7
    %v51 = vsub.s32 0, %v50
    %v52 = vrot.slane %v47, %v51
    %v58 = vunpack.c.l.b16 %v43
    %v59 = vunpack.c.l.b16 %v44
    %v60 = vunpack.c.l.b16 %v45
    %v61 = vunpack.c.l.b16 %v46
    %v62 = vpack.c.b16 %v59, %v58
    %v63 = vpack.c.b16 %v61, %v60
    %vm66 = vcmask 261120
    %v68 = vsel %vm66, %v42, 0
    %70 = vmatprep.subr.bf16.mxu0 0
    %71 = vmatpush1.bf16.msra.mxu0 %v62
    %72 = vmatprep.subr.bf16.mxu0 0
    %73 = vmatpush1.bf16.msra.mxu0 %v63
    %74 = vmatprep.subr.bf16.mxu0 0
    %75 = vmatpush1.bf16.msra.mxu0 0
    %76 = vmatprep.subr.bf16.mxu0 0
    %77 = vmatpush1.bf16.msra.mxu0 0
    %78 = vmatprep.subr.bf16.mxu0 0
    %79 = vmatpush1.bf16.msra.mxu0 0
    %80 = vmatprep.subr.bf16.mxu0 0
    %81 = vmatpush1.bf16.msra.mxu0 0
    %82 = vmatprep.subr.bf16.mxu0 0
    %83 = vmatpush1.bf16.msra.mxu0 0
    %84 = vmatprep.subr.bf16.mxu0 0
    %85 = vmatpush1.bf16.msra.mxu0 0
    %86 = vmatprep.subr.bf16.mxu0 0
    %87 = vmatpush1.bf16.msra.mxu0 0
    %88 = vmatprep.subr.bf16.mxu0 0
    %89 = vmatpush1.bf16.msra.mxu0 0
    %90 = vmatprep.subr.bf16.mxu0 0
    %91 = vmatpush1.bf16.msra.mxu0 0
    %92 = vmatprep.subr.bf16.mxu0 0
    %93 = vmatpush1.bf16.msra.mxu0 0
    %94 = vmatprep.subr.bf16.mxu0 0
    %95 = vmatpush1.bf16.msra.mxu0 0
    %96 = vmatprep.subr.bf16.mxu0 0
    %97 = vmatpush1.bf16.msra.mxu0 0
    %98 = vmatprep.subr.bf16.mxu0 0
    %99 = vmatpush1.bf16.msra.mxu0 0
    %100 = vmatprep.subr.bf16.mxu0 0
    %101 = vmatpush1.bf16.msra.mxu0 0
    %102 = vmatprep.mubr.bf16.mxu0 0
    %103 = vmatmul.mubr.bf16.gmra.mrb[0].mxu0 %v68
    %v104 = vpop.f32.mrb[0].mxu0
    %v105 = vadd.f32 %v52, %v104
    %v106 = vpop.f32.mrb[0].mxu0
    %v107 = vpop.f32.mrb[0].mxu0
    %v108 = vpop.f32.mrb[0].mxu0
    %109 = vdwg.mxu0
    %110 = vst [vmem:[#allocation7] sm:$0xff] %v105
    // Predicated region
    $region22: #{tpu_custom_call.1} parent=1 // pred_check
      _
    $region23: #{tpu_custom_call.1} parent=1 // pred_check_branch
      %112 = sbr.rel (0) target = $region25
    $region24: #{tpu_custom_call.1} parent=1 // pred_region
      %s114 = ssub.s32 128, 128
      %115 = vsyncadd [#allocation4], %s114
      %s117 = sshll.u32 [#allocation7], 4
      %s118 = int_to_ptr.vmem [resolvable:$true] %s117
      %120 = dma.vmem_to_hbm [thread:$0]  %s118, 128, %s3, [#allocation4]
    $region25: #{tpu_custom_call.1} parent=1 // pred_fallthru
      _
    // Predicated region
    $region26: #{tpu_custom_call.1} parent=1 // pred_check
      _
    $region27: #{tpu_custom_call.1} parent=1 // pred_check_branch
      %122 = sbr.rel (0) target = $region29
    $region28: #{tpu_custom_call.1} parent=1 // pred_region
      %123 = dma.done [#allocation4], 128
    $region29: #{tpu_custom_call.1} parent=1 // pred_fallthru
      _
    %124 = vsyncpa [#allocation3], 1
    %125 = vsyncpa [#allocation6], 1
    %126 = vsyncpa [#allocation4], 1

</llo_original>
